<compile_context>
chip_gen: v7x
topology: tpu7x:2x2x1
jax: 0.10.0
libtpu: 0.0.40
codegen_flags: <defaults>
</compile_context>

<pallas_src>
import jax
import jax.numpy as jnp
import numpy as np
from jax.experimental import pallas as pl
from jax.experimental.pallas import tpu as pltpu


def attention_kernel(len_ref, q_ref, key_ref, val_ref, attn_ref, ctx_ref):
    """One batch block per grid step.

    len_ref : (Bblk, 1)  int32   valid lengths
    q_ref   : (Bblk, D)          decoder query
    key_ref : (T, Bblk, D)       encoder keys, original time-major layout
    val_ref : (T, Bblk, Dv)      values, original time-major layout
    attn_ref: (Bblk, T)          lane-dense attention output
    ctx_ref : (Bblk, Dv)         lane-dense context output
    """
    f32 = jnp.float32
    neg_inf = jnp.float32(-1e9)

    q = q_ref[...].astype(f32)                                  # (Bblk, D)
    key_f = key_ref[...].astype(f32)                            # (T, Bblk, D)
    val_f = val_ref[...].astype(f32)                            # (T, Bblk, Dv)
    lens = len_ref[...]                                         # (Bblk, 1) int32

    # Dominant compute: one VPU multiply of the whole key tile against the
    # (leading-dim broadcast) query.
    prod = key_f * q[None, :, :]                                # (T, Bblk, D)

    # ------- time-major softmax path: feeds the context reduction -------
    # Everything stays 3-D with trailing keepdims dims, so no relayout
    # reshapes are ever needed (this is the flash-attention broadcast shape).
    e3 = jnp.sum(prod, axis=-1, keepdims=True)                  # (T, Bblk, 1)
    t3 = jax.lax.broadcasted_iota(jnp.int32, e3.shape, 0)       # time index
    e3 = jnp.where(t3 >= lens, neg_inf, e3)                     # masked energy
    m3 = jnp.max(e3, axis=0, keepdims=True)                     # (1, Bblk, 1)
    p3 = jnp.exp(e3 - m3)                                       # (T, Bblk, 1)
    s3 = jnp.sum(p3, axis=0, keepdims=True)                     # (1, Bblk, 1)
    inv_s3 = pl.reciprocal(s3, approx=False)                    # exact softmax
    attn3 = p3 * inv_s3                                         # (T, Bblk, 1)

    # context[b, :] = sum_t attn[t, b] * value[t, b, :] -- one broadcast
    # multiply + one leading-axis reduction (no serial MAC chain).
    ctx = jnp.sum(attn3 * val_f, axis=0)                        # (Bblk, Dv)
    ctx_ref[...] = ctx.astype(ctx_ref.dtype)

    # ------- lane-dense (Bblk, T) path: the attention-weight output -------
    # Re-reduce the shared product without keepdims (one extra XLU pass,
    # hidden under the key DMA) and transpose once; reuse the max/sum stats
    # from the time-major path (leading-dim squeeze is layout-free).
    e2 = jnp.sum(prod, axis=-1)                                 # (T, Bblk)
    energy = jnp.transpose(e2)                                  # (Bblk, T)
    t2 = jax.lax.broadcasted_iota(jnp.int32, energy.shape, 1)
    energy = jnp.where(t2 >= lens, neg_inf, energy)
    attn_bt = jnp.exp(energy - m3[0]) * pl.reciprocal(s3[0], approx=False)
    attn_ref[...] = attn_bt.astype(attn_ref.dtype)              # (Bblk, T)


def _physical_vmem_bytes():
    """Per-core VMEM capacity; conservative fallback if the query fails."""
    try:
        info = pltpu.get_tpu_info()
        for name in ("vmem_capacity_bytes", "vmem_size_bytes", "vmem_bytes"):
            v = getattr(info, name, None)
            if v:
                return int(v)
    except Exception:
        pass
    return 64 * 1024 * 1024      # v7x per-TensorCore size (smallest current gen)


def _pick_batch_block(B, T, D, Dv, key_dt, val_dt, q_dt, vmem_budget_bytes):
    """Largest batch block that (a) divides B, (b) is sublane-aligned
    (multiple of 8) unless it covers the whole batch, (c) keeps the
    double-buffered input/output tiles plus f32 in-kernel temporaries under
    the VMEM budget, and (d) is capped at B/2 so the parallel batch axis
    keeps >= 2 grid steps for v7x's two TensorCores."""
    if B % 8 != 0 or B < 16:
        return B                  # block dim == full array dim is always legal

    kb = jnp.dtype(key_dt).itemsize
    vb = jnp.dtype(val_dt).itemsize
    qb = jnp.dtype(q_dt).itemsize
    # Double-buffered pipeline copies of every in/out block, in HBM dtypes.
    io_bytes = 2 * (T * D * kb + T * Dv * vb + D * qb + 4 * (T + Dv + 1))
    # f32 in-kernel temporaries (key/value casts, key*q product, attention in
    # both layouts, context accumulator).
    work_bytes = 4 * (2 * T * D + 2 * T * Dv + 4 * T + D + Dv)
    per_row = io_bytes + work_bytes

    cap = B // 2 if (B // 2) % 8 == 0 else B
    best = 8
    for cand in range(8, cap + 1, 8):
        if B % cand == 0 and cand * per_row <= vmem_budget_bytes:
            best = cand
    return best


def attention(query, key, value, lengths, *, batch_block=None,
              vmem_budget_bytes=None):
    """query: (B, D), key: (T, B, D), value: (T, B, Dv), lengths: (B,) ints.

    Returns (attention (B, T) float32, context (B, Dv) float32), matching the
    PyTorch module's outputs."""
    T, B, D = key.shape
    Dv = value.shape[-1]
    assert query.shape == (B, D)

    lengths2d = jnp.asarray(lengths, dtype=jnp.int32).reshape(B, 1)

    phys_vmem = _physical_vmem_bytes()
    if vmem_budget_bytes is None:
        vmem_budget_bytes = phys_vmem // 2
    vmem_limit = int(min(phys_vmem, 128 << 20,
                         max((3 * phys_vmem) // 4,
                             vmem_budget_bytes + (8 << 20))))

    if batch_block is None:
        batch_block = _pick_batch_block(B, T, D, Dv, key.dtype, value.dtype,
                                        query.dtype, vmem_budget_bytes)
    assert B % batch_block == 0, "batch_block must divide the batch size"
    grid = (B // batch_block,)

    attn, ctx = pl.pallas_call(
        attention_kernel,
        out_shape=(jax.ShapeDtypeStruct((B, T), jnp.float32),
                   jax.ShapeDtypeStruct((B, Dv), jnp.float32)),
        grid=grid,
        in_specs=[
            pl.BlockSpec((batch_block, 1), lambda i: (i, 0)),          # lengths
            pl.BlockSpec((batch_block, D), lambda i: (i, 0)),          # query
            pl.BlockSpec((T, batch_block, D), lambda i: (0, i, 0)),    # key
            pl.BlockSpec((T, batch_block, Dv), lambda i: (0, i, 0)),   # value
        ],
        out_specs=(
            pl.BlockSpec((batch_block, T), lambda i: (i, 0)),          # attention
            pl.BlockSpec((batch_block, Dv), lambda i: (i, 0)),         # context
        ),
        compiler_params=pltpu.CompilerParams(
            dimension_semantics=("parallel",),
            vmem_limit_bytes=vmem_limit),
    )(lengths2d, query, key, value)

    return attn, ctx


if __name__ == "__main__":
    rng = jax.random.PRNGKey(0)
    k1, k2, k3, k4 = jax.random.split(rng, 4)

    T, B, D, Dv = 8, 16, 32, 32
    key_enc = jax.random.normal(k1, (T, B, D), dtype=jnp.float32)
    query = jax.random.normal(k2, (B, D), dtype=jnp.float32)
    value = jax.random.normal(k3, (T, B, Dv), dtype=jnp.float32)
    lengths = jax.random.randint(k4, (B,), 1, T + 1).astype(jnp.int32)

    # Let the picker choose the batch block (caps at B//2 = 8 -> grid of 2,
    # exercising the blocked, parallel grid path).
    attn, ctx = attention(query, key_enc, value, lengths)
    jax.block_until_ready((attn, ctx))

    # Plain-JAX reference (mirrors the PyTorch forward exactly).
    key_bm = jnp.transpose(key_enc, (1, 0, 2))
    val_bm = jnp.transpose(value, (1, 0, 2))
    energy_ref = jnp.einsum('btd,bd->bt', key_bm, query)
    mask = jnp.arange(T)[None, :] >= lengths[:, None]
    energy_ref = jnp.where(mask, jnp.float32(-1e9), energy_ref)
    attn_ref = jax.nn.softmax(energy_ref, axis=1)
    ctx_ref = jnp.einsum('bt,btd->bd', attn_ref, val_bm)

    assert np.allclose(np.asarray(attn), np.asarray(attn_ref),
                       rtol=1e-4, atol=1e-5), "attention mismatch"
    assert np.allclose(np.asarray(ctx), np.asarray(ctx_ref),
                       rtol=1e-4, atol=1e-5), "context mismatch"

    print("KERNEL_OK")
</pallas_src>

<mosaic_0001>
module attributes {stable_mosaic.version = 11 : i64} {
  func.func @attention_kernel(%arg0: i32, %arg1: memref<8x1xi32, #tpu.memory_space<vmem>>, %arg2: memref<8x32xf32, #tpu.memory_space<vmem>>, %arg3: memref<8x8x32xf32, #tpu.memory_space<vmem>>, %arg4: memref<8x8x32xf32, #tpu.memory_space<vmem>>, %arg5: memref<8x8xf32, #tpu.memory_space<vmem>>, %arg6: memref<8x32xf32, #tpu.memory_space<vmem>>) attributes {dimension_semantics = [#tpu.dimension_semantics<parallel>], iteration_bounds = array<i64: 2>, scalar_prefetch = 0 : i64, scratch_operands = 0 : i64, tpu.core_type = #tpu.core_type<tc>, window_params = [{transform_indices = @transform_0, window_bounds = array<i64: 8, 1>}, {transform_indices = @transform_1, window_bounds = array<i64: 8, 32>}, {transform_indices = @transform_2, window_bounds = array<i64: 8, 8, 32>}, {transform_indices = @transform_3, window_bounds = array<i64: 8, 8, 32>}, {transform_indices = @transform_4, window_bounds = array<i64: 8, 8>}, {transform_indices = @transform_5, window_bounds = array<i64: 8, 32>}]} {
    %c0 = arith.constant 0 : index
    %c0_0 = arith.constant 0 : index
    %0 = vector.load %arg2[%c0, %c0_0] : memref<8x32xf32, #tpu.memory_space<vmem>>, vector<8x32xf32>
    %c0_1 = arith.constant 0 : index
    %c0_2 = arith.constant 0 : index
    %c0_3 = arith.constant 0 : index
    %1 = vector.load %arg3[%c0_1, %c0_2, %c0_3] : memref<8x8x32xf32, #tpu.memory_space<vmem>>, vector<8x8x32xf32>
    %c0_4 = arith.constant 0 : index
    %c0_5 = arith.constant 0 : index
    %c0_6 = arith.constant 0 : index
    %2 = vector.load %arg4[%c0_4, %c0_5, %c0_6] : memref<8x8x32xf32, #tpu.memory_space<vmem>>, vector<8x8x32xf32>
    %c0_7 = arith.constant 0 : index
    %c0_8 = arith.constant 0 : index
    %3 = vector.load %arg1[%c0_7, %c0_8] : memref<8x1xi32, #tpu.memory_space<vmem>>, vector<8x1xi32>
    %4 = vector.shape_cast %0 : vector<8x32xf32> to vector<1x8x32xf32>
    %5 = vector.broadcast %4 : vector<1x8x32xf32> to vector<8x8x32xf32>
    %6 = arith.mulf %1, %5 : vector<8x8x32xf32>
    %cst = arith.constant dense<0.000000e+00> : vector<8x8xf32>
    %7 = vector.multi_reduction <add>, %6, %cst [2] : vector<8x8x32xf32> to vector<8x8xf32>
    %8 = vector.shape_cast %7 : vector<8x8xf32> to vector<8x8x1xf32>
    %9 = tpu.iota {dimensions = array<i32: 0>} : vector<8x8x1xi32>
    %10 = vector.shape_cast %3 : vector<8x1xi32> to vector<1x8x1xi32>
    %11 = vector.broadcast %10 : vector<1x8x1xi32> to vector<8x8x1xi32>
    %12 = arith.cmpi sge, %9, %11 : vector<8x8x1xi32>
    %cst_9 = arith.constant -1.000000e+09 : f32
    %13 = vector.broadcast %cst_9 : f32 to vector<8x8x1xf32>
    %14 = arith.select %12, %13, %8 : vector<8x8x1xi1>, vector<8x8x1xf32>
    %cst_10 = arith.constant dense<0xFF800000> : vector<8x1xf32>
    %15 = vector.multi_reduction <maximumf>, %14, %cst_10 [0] : vector<8x8x1xf32> to vector<8x1xf32>
    %16 = vector.shape_cast %15 : vector<8x1xf32> to vector<1x8x1xf32>
    %17 = vector.broadcast %16 : vector<1x8x1xf32> to vector<8x8x1xf32>
    %18 = arith.subf %14, %17 : vector<8x8x1xf32>
    %19 = math.exp %18 : vector<8x8x1xf32>
    %cst_11 = arith.constant dense<0.000000e+00> : vector<8x1xf32>
    %20 = vector.multi_reduction <add>, %19, %cst_11 [0] : vector<8x8x1xf32> to vector<8x1xf32>
    %21 = vector.shape_cast %20 : vector<8x1xf32> to vector<1x8x1xf32>
    %22 = tpu.reciprocal %21 : vector<1x8x1xf32> -> vector<1x8x1xf32>
    %23 = vector.broadcast %22 : vector<1x8x1xf32> to vector<8x8x1xf32>
    %24 = arith.mulf %19, %23 : vector<8x8x1xf32>
    %25 = vector.broadcast %24 : vector<8x8x1xf32> to vector<8x8x32xf32>
    %26 = arith.mulf %25, %2 : vector<8x8x32xf32>
    %cst_12 = arith.constant dense<0.000000e+00> : vector<8x32xf32>
    %27 = vector.multi_reduction <add>, %26, %cst_12 [0] : vector<8x8x32xf32> to vector<8x32xf32>
    %c0_13 = arith.constant 0 : index
    %c0_14 = arith.constant 0 : index
    %28 = vector.load %arg6[%c0_13, %c0_14] : memref<8x32xf32, #tpu.memory_space<vmem>>, vector<8x32xf32>
    tpu.vector_store %arg6[%c0_13, %c0_14], %27 {strides = array<i32>} : memref<8x32xf32, #tpu.memory_space<vmem>>, vector<8x32xf32>,
    %cst_15 = arith.constant dense<0.000000e+00> : vector<8x8xf32>
    %29 = vector.multi_reduction <add>, %6, %cst_15 [2] : vector<8x8x32xf32> to vector<8x8xf32>
    %30 = tpu.transpose %29, [1, 0] : vector<8x8xf32> -> vector<8x8xf32>
    %31 = tpu.iota {dimensions = array<i32: 1>} : vector<8x8xi32>
    %32 = vector.broadcast %3 : vector<8x1xi32> to vector<8x8xi32>
    %33 = arith.cmpi sge, %31, %32 : vector<8x8xi32>
    %cst_16 = arith.constant -1.000000e+09 : f32
    %34 = vector.broadcast %cst_16 : f32 to vector<8x8xf32>
    %35 = arith.select %33, %34, %30 : vector<8x8xi1>, vector<8x8xf32>
    %36 = vector.shape_cast %16 : vector<1x8x1xf32> to vector<8x1xf32>
    %37 = vector.broadcast %36 : vector<8x1xf32> to vector<8x8xf32>
    %38 = arith.subf %35, %37 : vector<8x8xf32>
    %39 = math.exp %38 : vector<8x8xf32>
    %40 = vector.shape_cast %21 : vector<1x8x1xf32> to vector<8x1xf32>
    %41 = tpu.reciprocal %40 : vector<8x1xf32> -> vector<8x1xf32>
    %42 = vector.broadcast %41 : vector<8x1xf32> to vector<8x8xf32>
    %43 = arith.mulf %39, %42 : vector<8x8xf32>
    %c0_17 = arith.constant 0 : index
    %c0_18 = arith.constant 0 : index
    %44 = vector.load %arg5[%c0_17, %c0_18] : memref<8x8xf32, #tpu.memory_space<vmem>>, vector<8x8xf32>
    tpu.vector_store %arg5[%c0_17, %c0_18], %43 {strides = array<i32>} : memref<8x8xf32, #tpu.memory_space<vmem>>, vector<8x8xf32>,
    return
  }
  func.func @transform_0(%arg0: i32) -> (i32, i32) {
    %c0_i32 = arith.constant 0 : i32
    %c0_i32_0 = arith.constant 0 : i32
    return %arg0, %c0_i32 : i32, i32
  }
  func.func @transform_1(%arg0: i32) -> (i32, i32) {
    %c0_i32 = arith.constant 0 : i32
    %c0_i32_0 = arith.constant 0 : i32
    return %arg0, %c0_i32 : i32, i32
  }
  func.func @transform_2(%arg0: i32) -> (i32, i32, i32) {
    %c0_i32 = arith.constant 0 : i32
    %c0_i32_0 = arith.constant 0 : i32
    %c0_i32_1 = arith.constant 0 : i32
    return %c0_i32, %arg0, %c0_i32_0 : i32, i32, i32
  }
  func.func @transform_3(%arg0: i32) -> (i32, i32, i32) {
    %c0_i32 = arith.constant 0 : i32
    %c0_i32_0 = arith.constant 0 : i32
    %c0_i32_1 = arith.constant 0 : i32
    return %c0_i32, %arg0, %c0_i32_0 : i32, i32, i32
  }
  func.func @transform_4(%arg0: i32) -> (i32, i32) {
    %c0_i32 = arith.constant 0 : i32
    %c0_i32_0 = arith.constant 0 : i32
    return %arg0, %c0_i32 : i32, i32
  }
  func.func @transform_5(%arg0: i32) -> (i32, i32) {
    %c0_i32 = arith.constant 0 : i32
    %c0_i32_0 = arith.constant 0 : i32
    return %arg0, %c0_i32 : i32, i32
  }
}

</mosaic_0001>

<llo_original>
// kernel: tpu_custom_call.1
$region0: #{tpu_custom_call.1}
  #allocation0 [shape = 'u32[]', space=smem, size = 0x4, offset = 0x4, fixed_abs, tag = 'smem constant byte address 0x4 - core index']
  #allocation1 [shape = 'u32[144,128]{1,0:T(1,128)}', space=vmem, size = 0x12000, scoped, tag = 'internal scratch']
  %s0 = inlined_call_operand.vmem [shape: s32[16,1], index: 0, kind: input, shape index: {}]
  %s1 = inlined_call_operand.vmem [shape: f32[16,32], index: 1, kind: input, shape index: {}]
  %s2 = inlined_call_operand.hbm [shape: f32[8,16,32], index: 2, kind: input, shape index: {}]
  %s3 = inlined_call_operand.hbm [shape: f32[8,16,32], index: 3, kind: input, shape index: {}]
  %s4 = inlined_call_operand.vmem [shape: f32[16,8], index: 4, kind: output, shape index: {0}]
  %s5 = inlined_call_operand.hbm [shape: f32[16,32], index: 5, kind: output, shape index: {1}]
  %6 = xla_tuple %s4, %s5
  %s7 = sld [smem:[#allocation0]]
  $region65: #{tpu_custom_call.1} parent=0
    _
  %s9 = ssub.s32 1, %s7
  %s10 = scalar_select 0, %s9, %s7
  $region1: #{tpu_custom_call.1} parent=0
    #allocation2 [shape = 'u8[65536]{0}', space=vmem, size = 0x10000, scoped, tag = 'input window, operand 2']
    #allocation3 [shape = 's32[2]{0}', space=sflag, size = 0x8, scoped, tag = 'scoped memory for tpu_custom_call.1']
    #allocation4 [shape = 's32[2]{0}', space=sflag, size = 0x8, scoped, tag = 'scoped memory for tpu_custom_call.1']
    #allocation5 [shape = 'u8[65536]{0}', space=vmem, size = 0x10000, scoped, tag = 'input window, operand 3']
    #allocation6 [shape = 's32[2]{0}', space=sflag, size = 0x8, scoped, tag = 'scoped memory for tpu_custom_call.1']
    #allocation7 [shape = 'u8[8192]{0}', space=vmem, size = 0x2000, scoped, tag = 'output window, operand 1']
    %11 = vsyncpa [#allocation3], 0
    %s12 = scalar_lea.sflag [#allocation3], 1
    %13 = vsyncpa %s12, 0
    %14 = vsyncpa [#allocation6], 0
    %s15 = scalar_lea.sflag [#allocation6], 1
    %16 = vsyncpa %s15, 0
    %17 = vsyncpa [#allocation4], 0
    %s18 = scalar_lea.sflag [#allocation4], 1
    %19 = vsyncpa %s18, 0
    loop: start=0, step=1, limit=4
    $region2: #{tpu_custom_call.1} parent=1 // loop_pre_header
      _
    $region3: #{tpu_custom_call.1} parent=1 // loop_header
      %s21 = sphi 0, %s25
      %p22 = scmp.ge.s32.totalorder %s21, 4
      %s31 = sphi 0, %s33
      %s34 = sphi 0, %s31
      %s35 = sphi 0, %s34
      %s51 = sphi 0, %s35
      %s57 = sphi 0, %s59
      %s60 = sphi 0, %s57
      %s61 = sphi 0, %s60
      %s77 = sphi 0, %s61
      %s83 = sphi 0, %s85
      %s86 = sphi 0, %s83
      %s87 = sphi 0, %s86
      %s103 = sphi 0, %s87
      %s109 = sphi 0, %s111
      %s112 = sphi 0, %s109
      %s113 = sphi 0, %s112
      %s129 = sphi 0, %s113
      %s135 = sphi 0, %s137
      %s138 = sphi 0, %s135
      %s139 = sphi 0, %s138
      %s155 = sphi 0, %s139
      %s161 = sphi 0, %s163
      %s164 = sphi 0, %s161
      %s165 = sphi 0, %s164
      %s181 = sphi 0, %s165
    $region4: #{tpu_custom_call.1} parent=1 // loop_header_branch
      %24 = sbr.rel (%p22) target = $region8
    $region5: #{tpu_custom_call.1} parent=1 // loop_body
      %s26 = ssub.s32 %s21, 1
      %s27 = ssub.s32 %s21, 2
      %s28 = sadd.s32 %s21, 1
      %s29 = ssub.s32 %s21, %s28
      %p30 = scmp.eq.s32.totalorder %s29, 0
      %s32 = sadd.s32 %s31, 1
      %s33 = scalar_select %p30, %s31, %s32
      %p36 = pneg %p30
      %p37 = scmp.eq.s32.totalorder %s21, 1
      %p38 = por %p36, %p37
      %p39 = scmp.ne.s32.totalorder %s31, %s34
      %p40 = scmp.eq.s32.totalorder %s21, 0
      %p41 = por %p39, %p40
      %p42 = scmp.ne.s32.totalorder %s31, %s34
      %p43 = scmp.eq.s32.totalorder %s26, 1
      %p44 = por %p42, %p43
      %p45 = scmp.ne.s32.totalorder %s34, %s35
      %p46 = scmp.eq.s32.totalorder %s26, 0
      %p47 = por %p45, %p46
      %p48 = scmp.ne.s32.totalorder %s34, %s35
      %p49 = scmp.eq.s32.totalorder %s27, 1
      %p50 = por %p48, %p49
      %p52 = scmp.ne.s32.totalorder %s35, %s51
      %p53 = scmp.eq.s32.totalorder %s27, 0
      %p54 = por %p52, %p53
      %s55 = ssub.s32 %s21, %s28
      %p56 = scmp.eq.s32.totalorder %s55, 0
      %s58 = sadd.s32 %s57, 1
      %s59 = scalar_select %p56, %s57, %s58
      %p62 = pneg %p56
      %p63 = scmp.eq.s32.totalorder %s21, 1
      %p64 = por %p62, %p63
      %p65 = scmp.ne.s32.totalorder %s57, %s60
      %p66 = scmp.eq.s32.totalorder %s21, 0
      %p67 = por %p65, %p66
      %p68 = scmp.ne.s32.totalorder %s57, %s60
      %p69 = scmp.eq.s32.totalorder %s26, 1
      %p70 = por %p68, %p69
      %p71 = scmp.ne.s32.totalorder %s60, %s61
      %p72 = scmp.eq.s32.totalorder %s26, 0
      %p73 = por %p71, %p72
      %p74 = scmp.ne.s32.totalorder %s60, %s61
      %p75 = scmp.eq.s32.totalorder %s27, 1
      %p76 = por %p74, %p75
      %p78 = scmp.ne.s32.totalorder %s61, %s77
      %p79 = scmp.eq.s32.totalorder %s27, 0
      %p80 = por %p78, %p79
      %s81 = ssub.s32 %s21, %s28
      %p82 = scmp.eq.s32.totalorder %s81, 0
      %s84 = sadd.s32 %s83, 1
      %s85 = scalar_select %p82, %s83, %s84
      %p88 = pneg %p82
      %p89 = scmp.eq.s32.totalorder %s21, 1
      %p90 = por %p88, %p89
      %p91 = scmp.ne.s32.totalorder %s83, %s86
      %p92 = scmp.eq.s32.totalorder %s21, 0
      %p93 = por %p91, %p92
      %p94 = scmp.ne.s32.totalorder %s83, %s86
      %p95 = scmp.eq.s32.totalorder %s26, 1
      %p96 = por %p94, %p95
      %p97 = scmp.ne.s32.totalorder %s86, %s87
      %p98 = scmp.eq.s32.totalorder %s26, 0
      %p99 = por %p97, %p98
      %p100 = scmp.ne.s32.totalorder %s86, %s87
      %p101 = scmp.eq.s32.totalorder %s27, 1
      %p102 = por %p100, %p101
      %p104 = scmp.ne.s32.totalorder %s87, %s103
      %p105 = scmp.eq.s32.totalorder %s27, 0
      %p106 = por %p104, %p105
      %s107 = ssub.s32 %s21, %s28
      %p108 = scmp.eq.s32.totalorder %s107, 0
      %s110 = sadd.s32 %s109, 1
      %s111 = scalar_select %p108, %s109, %s110
      %p114 = pneg %p108
      %p115 = scmp.eq.s32.totalorder %s21, 1
      %p116 = por %p114, %p115
      %p117 = scmp.ne.s32.totalorder %s109, %s112
      %p118 = scmp.eq.s32.totalorder %s21, 0
      %p119 = por %p117, %p118
      %p120 = scmp.ne.s32.totalorder %s109, %s112
      %p121 = scmp.eq.s32.totalorder %s26, 1
      %p122 = por %p120, %p121
      %p123 = scmp.ne.s32.totalorder %s112, %s113
      %p124 = scmp.eq.s32.totalorder %s26, 0
      %p125 = por %p123, %p124
      %p126 = scmp.ne.s32.totalorder %s112, %s113
      %p127 = scmp.eq.s32.totalorder %s27, 1
      %p128 = por %p126, %p127
      %p130 = scmp.ne.s32.totalorder %s113, %s129
      %p131 = scmp.eq.s32.totalorder %s27, 0
      %p132 = por %p130, %p131
      %s133 = ssub.s32 %s21, %s28
      %p134 = scmp.eq.s32.totalorder %s133, 0
      %s136 = sadd.s32 %s135, 1
      %s137 = scalar_select %p134, %s135, %s136
      %p140 = pneg %p134
      %p141 = scmp.eq.s32.totalorder %s21, 1
      %p142 = por %p140, %p141
      %p143 = scmp.ne.s32.totalorder %s135, %s138
      %p144 = scmp.eq.s32.totalorder %s21, 0
      %p145 = por %p143, %p144
      %p146 = scmp.ne.s32.totalorder %s135, %s138
      %p147 = scmp.eq.s32.totalorder %s26, 1
      %p148 = por %p146, %p147
      %p149 = scmp.ne.s32.totalorder %s138, %s139
      %p150 = scmp.eq.s32.totalorder %s26, 0
      %p151 = por %p149, %p150
      %p152 = scmp.ne.s32.totalorder %s138, %s139
      %p153 = scmp.eq.s32.totalorder %s27, 1
      %p154 = por %p152, %p153
      %p156 = scmp.ne.s32.totalorder %s139, %s155
      %p157 = scmp.eq.s32.totalorder %s27, 0
      %p158 = por %p156, %p157
      %s159 = ssub.s32 %s21, %s28
      %p160 = scmp.eq.s32.totalorder %s159, 0
      %s162 = sadd.s32 %s161, 1
      %s163 = scalar_select %p160, %s161, %s162
      %p166 = pneg %p160
      %p167 = scmp.eq.s32.totalorder %s21, 1
      %p168 = por %p166, %p167
      %p169 = scmp.ne.s32.totalorder %s161, %s164
      %p170 = scmp.eq.s32.totalorder %s21, 0
      %p171 = por %p169, %p170
      %p172 = scmp.ne.s32.totalorder %s161, %s164
      %p173 = scmp.eq.s32.totalorder %s26, 1
      %p174 = por %p172, %p173
      %p175 = scmp.ne.s32.totalorder %s164, %s165
      %p176 = scmp.eq.s32.totalorder %s26, 0
      %p177 = por %p175, %p176
      %p178 = scmp.ne.s32.totalorder %s164, %s165
      %p179 = scmp.eq.s32.totalorder %s27, 1
      %p180 = por %p178, %p179
      %p182 = scmp.ne.s32.totalorder %s165, %s181
      %p183 = scmp.eq.s32.totalorder %s27, 0
      %p184 = por %p182, %p183
      %p185 = scmp.le.s32.totalorder 1, %s21
      %p186 = scmp.lt.s32.totalorder %s21, 3
      %p187 = pnand %p185, %p186
      %p188 = pneg %p187
      // Predicated region
      $region9: #{tpu_custom_call.1} parent=5 // pred_check
        _
      $region10: #{tpu_custom_call.1} parent=5 // pred_check_branch
        %190 = sbr.rel (%p187) target = $region12
      $region11: #{tpu_custom_call.1} parent=5 // pred_region
        %s191 = ssub.s32 %s21, 1
      $region12: #{tpu_custom_call.1} parent=5 // pred_fallthru
        _
      %p192 = scmp.lt.s32.totalorder %s21, 2
      // Predicated region
      $region13: #{tpu_custom_call.1} parent=5 // pred_check
        %p193 = pneg %p192
      $region14: #{tpu_custom_call.1} parent=5 // pred_check_branch
        %195 = sbr.rel (%p193) target = $region16
      $region15: #{tpu_custom_call.1} parent=5 // pred_region
        // Predicated region
        $region17: #{tpu_custom_call.1} parent=15 // pred_check
          %p196 = pneg %p41
        $region18: #{tpu_custom_call.1} parent=15 // pred_check_branch
          %198 = sbr.rel (%p196) target = $region20
        $region19: #{tpu_custom_call.1} parent=15 // pred_region
          %p199 = scmp.lt.s32.totalorder %s21, 1
          %s200 = scalar_select %p199, %s21, 1
          %s201 = smul.addr %s200, 8
          %s202 = scalar_lea.vmem %s0, %s201
        $region20: #{tpu_custom_call.1} parent=15 // pred_fallthru
          _
        // Predicated region
        $region21: #{tpu_custom_call.1} parent=15 // pred_check
          %p203 = pneg %p67
        $region22: #{tpu_custom_call.1} parent=15 // pred_check_branch
          %205 = sbr.rel (%p203) target = $region24
        $region23: #{tpu_custom_call.1} parent=15 // pred_region
          %p206 = scmp.lt.s32.totalorder %s21, 1
          %s207 = scalar_select %p206, %s21, 1
          %s208 = smul.addr %s207, 8
          %s209 = scalar_lea.vmem %s1, %s208
        $region24: #{tpu_custom_call.1} parent=15 // pred_fallthru
          _
        // Predicated region
        $region25: #{tpu_custom_call.1} parent=15 // pred_check
          %p210 = pneg %p93
        $region26: #{tpu_custom_call.1} parent=15 // pred_check_branch
          %212 = sbr.rel (%p210) target = $region28
        $region27: #{tpu_custom_call.1} parent=15 // pred_region
          %s213 = sand.u32 %s83, 1
          %s214 = scalar_lea.sflag [#allocation3], %s213
          %s215 = sand.u32 %s83, 1
          %s216 = smul.addr %s215, 64
          %s217 = scalar_lea.vmem [#allocation2], %s216
          %s219 = ssub.s32 1024, 1024
          %220 = vsyncadd %s214, %s219
          %s221 = smul.addr %s21, 128
          %s222 = scalar_lea.hbm %s2, %s221
          %s223 = sshll.u32 %s217, 4
          %s224 = int_to_ptr.vmem [resolvable:$true] %s223
          %229 = dma.hbm_to_vmem [thread:$0]  %s222, 1024, %s224, %s214, 256, 128, 8
        $region28: #{tpu_custom_call.1} parent=15 // pred_fallthru
          _
        // Predicated region
        $region29: #{tpu_custom_call.1} parent=15 // pred_check
          %p230 = pneg %p119
        $region30: #{tpu_custom_call.1} parent=15 // pred_check_branch
          %232 = sbr.rel (%p230) target = $region32
        $region31: #{tpu_custom_call.1} parent=15 // pred_region
          %s233 = sand.u32 %s109, 1
          %s234 = scalar_lea.sflag [#allocation6], %s233
          %s235 = sand.u32 %s109, 1
          %s236 = smul.addr %s235, 64
          %s237 = scalar_lea.vmem [#allocation5], %s236
          %s239 = ssub.s32 1024, 1024
          %240 = vsyncadd %s234, %s239
          %s241 = smul.addr %s21, 128
          %s242 = scalar_lea.hbm %s3, %s241
          %s243 = sshll.u32 %s237, 4
          %s244 = int_to_ptr.vmem [resolvable:$true] %s243
          %249 = dma.hbm_to_vmem [thread:$0]  %s242, 1024, %s244, %s234, 256, 128, 8
        $region32: #{tpu_custom_call.1} parent=15 // pred_fallthru
          _
      $region16: #{tpu_custom_call.1} parent=5 // pred_fallthru
        _
      %p250 = scmp.le.s32.totalorder 1, %s21
      %p251 = scmp.lt.s32.totalorder %s21, 3
      %p252 = pnand %p250, %p251
      %p253 = pneg %p252
      // Predicated region
      $region33: #{tpu_custom_call.1} parent=5 // pred_check
        _
      $region34: #{tpu_custom_call.1} parent=5 // pred_check_branch
        %255 = sbr.rel (%p252) target = $region36
      $region35: #{tpu_custom_call.1} parent=5 // pred_region
        %s256 = ssub.s32 %s21, 1
        %s257 = sand.u32 %s86, 1
        %s258 = scalar_lea.sflag [#allocation3], %s257
        %s259 = sand.u32 %s86, 1
        %s260 = smul.addr %s259, 64
        %s261 = scalar_lea.vmem [#allocation2], %s260
        // Predicated region
        $region37: #{tpu_custom_call.1} parent=35 // pred_check
          %p262 = pneg %p99
        $region38: #{tpu_custom_call.1} parent=35 // pred_check_branch
          %264 = sbr.rel (%p262) target = $region40
        $region39: #{tpu_custom_call.1} parent=35 // pred_region
          %265 = dma.done %s258, 1024
        $region40: #{tpu_custom_call.1} parent=35 // pred_fallthru
          _
        %s266 = sand.u32 %s112, 1
        %s267 = scalar_lea.sflag [#allocation6], %s266
        %s268 = sand.u32 %s112, 1
        %s269 = smul.addr %s268, 64
        %s270 = scalar_lea.vmem [#allocation5], %s269
        // Predicated region
        $region41: #{tpu_custom_call.1} parent=35 // pred_check
          %p271 = pneg %p125
        $region42: #{tpu_custom_call.1} parent=35 // pred_check_branch
          %273 = sbr.rel (%p271) target = $region44
        $region43: #{tpu_custom_call.1} parent=35 // pred_region
          %274 = dma.done %s267, 1024
        $region44: #{tpu_custom_call.1} parent=35 // pred_fallthru
          _
        %p275 = scmp.lt.s32.totalorder %s26, 1
        %s276 = scalar_select %p275, %s26, 1
        %s277 = smul.addr %s276, 8
        %s278 = scalar_lea.vmem %s0, %s277
        %p279 = pneg %p47
        %p280 = pneg %p44
        %p281 = scmp.lt.s32.totalorder %s26, 1
        %s282 = scalar_select %p281, %s26, 1
        %s283 = smul.addr %s282, 8
        %s284 = scalar_lea.vmem %s1, %s283
        %p285 = pneg %p73
        %p286 = pneg %p70
        %s287 = sand.u32 %s86, 1
        %s288 = scalar_lea.sflag [#allocation3], %s287
        %s289 = sand.u32 %s86, 1
        %s290 = smul.addr %s289, 64
        %s291 = scalar_lea.vmem [#allocation2], %s290
        %p292 = pneg %p99
        %p293 = pneg %p96
        %s294 = sand.u32 %s112, 1
        %s295 = scalar_lea.sflag [#allocation6], %s294
        %s296 = sand.u32 %s112, 1
        %s297 = smul.addr %s296, 64
        %s298 = scalar_lea.vmem [#allocation5], %s297
        %p299 = pneg %p125
        %p300 = pneg %p122
        %p301 = pneg %p151
        %p302 = pneg %p148
        %p303 = scmp.lt.s32.totalorder %s26, 1
        %s304 = scalar_select %p303, %s26, 1
        %s305 = smul.addr %s304, 8
        %s306 = scalar_lea.vmem %s4, %s305
        %p307 = pneg %p177
        %p308 = pneg %p174
        %s309 = sand.u32 %s164, 1
        %s310 = scalar_lea.sflag [#allocation4], %s309
        %s311 = sand.u32 %s164, 1
        %s312 = smul.addr %s311, 8
        %s313 = scalar_lea.vmem [#allocation7], %s312
        %p314 = scmp.lt.s32.totalorder %s26, 1
        %s315 = scalar_select %p314, %s26, 1
        %s316 = smul.addr %s315, 8
        %s317 = scalar_lea.vmem %s0, %s316
        %p318 = scmp.lt.s32.totalorder %s26, 1
        %s319 = scalar_select %p318, %s26, 1
        %s320 = smul.addr %s319, 8
        %s321 = scalar_lea.vmem %s1, %s320
        %p322 = scmp.lt.s32.totalorder %s26, 1
        %s323 = scalar_select %p322, %s26, 1
        %s324 = smul.addr %s323, 8
        %s325 = scalar_lea.vmem %s4, %s324
        %v326 = vld [vmem:[%s321] sm:$0xff]
        %v327 = vld [vmem:[%s261] sm:$0xff]
        %v328 = vld [vmem:[%s261 + $0x8] sm:$0xff]
        %v329 = vld [vmem:[%s261 + $0x10] sm:$0xff]
        %v330 = vld [vmem:[%s261 + $0x18] sm:$0xff]
        %v331 = vld [vmem:[%s261 + $0x20] sm:$0xff]
        %v332 = vld [vmem:[%s261 + $0x28] sm:$0xff]
        %v333 = vld [vmem:[%s261 + $0x30] sm:$0xff]
        %v334 = vld [vmem:[%s261 + $0x38] sm:$0xff]
        %v335 = vld [vmem:[%s270] sm:$0xff]
        %v336 = vld [vmem:[%s270 + $0x8] sm:$0xff]
        %v337 = vld [vmem:[%s270 + $0x10] sm:$0xff]
        %v338 = vld [vmem:[%s270 + $0x18] sm:$0xff]
        %v339 = vld [vmem:[%s270 + $0x20] sm:$0xff]
        %v340 = vld [vmem:[%s270 + $0x28] sm:$0xff]
        %v341 = vld [vmem:[%s270 + $0x30] sm:$0xff]
        %v342 = vld [vmem:[%s270 + $0x38] sm:$0xff]
        %v343 = vld [vmem:[%s317] sm:$0xff]
        %v344 = vmul.f32 %v327, %v326
        %v345 = vmul.f32 %v328, %v326
        %v346 = vmul.f32 %v329, %v326
        %v347 = vmul.f32 %v330, %v326
        %v348 = vmul.f32 %v331, %v326
        %v349 = vmul.f32 %v332, %v326
        %v350 = vmul.f32 %v333, %v326
        %v351 = vmul.f32 %v334, %v326
        %vm352 = vcmask 261120
        %v353 = vsel %vm352, %v344, 0.0
        %354 = vadd.xlane.f32.xlu0 %v353
        %v355 = vpop.xlane.xlu0 %354
        %v356 = vsel %vm352, %v345, 0.0
        %357 = vadd.xlane.f32.xlu0 %v356
        %v358 = vpop.xlane.xlu0 %357
        %v359 = vsel %vm352, %v346, 0.0
        %360 = vadd.xlane.f32.xlu0 %v359
        %v361 = vpop.xlane.xlu0 %360
        %v362 = vsel %vm352, %v347, 0.0
        %363 = vadd.xlane.f32.xlu0 %v362
        %v364 = vpop.xlane.xlu0 %363
        %v365 = vsel %vm352, %v348, 0.0
        %366 = vadd.xlane.f32.xlu0 %v365
        %v367 = vpop.xlane.xlu0 %366
        %v368 = vsel %vm352, %v349, 0.0
        %369 = vadd.xlane.f32.xlu0 %v368
        %v370 = vpop.xlane.xlu0 %369
        %v371 = vsel %vm352, %v350, 0.0
        %372 = vadd.xlane.f32.xlu0 %v371
        %v373 = vpop.xlane.xlu0 %372
        %v374 = vsel %vm352, %v351, 0.0
        %375 = vadd.xlane.f32.xlu0 %v374
        %v376 = vpop.xlane.xlu0 %375
        %vm377 = vcmp.le.s32.totalorder %v343, 0
        %vm378 = vcmp.le.s32.totalorder %v343, 1
        %vm379 = vcmp.le.s32.totalorder %v343, 2
        %vm380 = vcmp.le.s32.totalorder %v343, 3
        %vm381 = vcmp.le.s32.totalorder %v343, 4
        %vm382 = vcmp.le.s32.totalorder %v343, 5
        %vm383 = vcmp.le.s32.totalorder %v343, 6
        %vm384 = vcmp.le.s32.totalorder %v343, 7
        %v385 = vsel %vm377, -1e+09, %v355
        %v386 = vsel %vm378, -1e+09, %v358
        %v387 = vsel %vm379, -1e+09, %v361
        %v388 = vsel %vm380, -1e+09, %v364
        %v389 = vsel %vm381, -1e+09, %v367
        %v390 = vsel %vm382, -1e+09, %v370
        %v391 = vsel %vm383, -1e+09, %v373
        %v392 = vsel %vm384, -1e+09, %v376
        %vm393 = vcmask 7168
        %v394 = vsel %vm393, %v385, -inf
        %v395 = vsel %vm393, %v386, -inf
        %v396 = vsel %vm393, %v387, -inf
        %v397 = vsel %vm393, %v388, -inf
        %v398 = vsel %vm393, %v389, -inf
        %v399 = vmax.f32 %v394, %v398
        %v400 = vsel %vm393, %v390, -inf
        %v401 = vmax.f32 %v395, %v400
        %v402 = vsel %vm393, %v391, -inf
        %v403 = vmax.f32 %v396, %v402
        %v404 = vsel %vm393, %v392, -inf
        %v405 = vmax.f32 %v397, %v404
        %v406 = vmax.f32 %v399, %v401
        %v407 = vmax.f32 %v403, %v405
        %v408 = vmax.f32 %v406, %v407
        %v409 = vsub.f32 %v385, %v408
        %v410 = vsub.f32 %v386, %v408
        %v411 = vsub.f32 %v387, %v408
        %v412 = vsub.f32 %v388, %v408
        %v413 = vsub.f32 %v389, %v408
        %v414 = vsub.f32 %v390, %v408
        %v415 = vsub.f32 %v391, %v408
        %v416 = vsub.f32 %v392, %v408
        %v417 = vmul.f32 %v409, 1.442695
        %v418 = vpow.pop %v417
        %v419 = vmul.f32 %v410, 1.442695
        %v420 = vpow.pop %v419
        %v421 = vmul.f32 %v411, 1.442695
        %v422 = vpow.pop %v421
        %v423 = vmul.f32 %v412, 1.442695
        %v424 = vpow.pop %v423
        %v425 = vmul.f32 %v413, 1.442695
        %v426 = vpow.pop %v425
        %v427 = vmul.f32 %v414, 1.442695
        %v428 = vpow.pop %v427
        %v429 = vmul.f32 %v415, 1.442695
        %v430 = vpow.pop %v429
        %v431 = vmul.f32 %v416, 1.442695
        %v432 = vpow.pop %v431
        %v433 = vsel %vm393, %v418, 0.0
        %v434 = vsel %vm393, %v420, 0.0
        %v435 = vadd.f32 %v433, %v434
        %v436 = vsel %vm393, %v422, 0.0
        %v437 = vadd.f32 %v435, %v436
        %v438 = vsel %vm393, %v424, 0.0
        %v439 = vadd.f32 %v437, %v438
        %v440 = vsel %vm393, %v426, 0.0
        %v441 = vadd.f32 %v439, %v440
        %v442 = vsel %vm393, %v428, 0.0
        %v443 = vadd.f32 %v441, %v442
        %v444 = vsel %vm393, %v430, 0.0
        %v445 = vadd.f32 %v443, %v444
        %v446 = vsel %vm393, %v432, 0.0
        %v447 = vadd.f32 %v445, %v446
        %v448 = vrcp.pop %v447
        %v449 = vmul.f32 %v418, %v448
        %v450 = vmul.f32 %v420, %v448
        %v451 = vmul.f32 %v422, %v448
        %v452 = vmul.f32 %v424, %v448
        %v453 = vmul.f32 %v426, %v448
        %v454 = vmul.f32 %v428, %v448
        %v455 = vmul.f32 %v430, %v448
        %v456 = vmul.f32 %v432, %v448
        %458 = vset.pattern.permute.xlu0 0
        %459 = vperm.xlu0 %458, %v449
        %v460 = vpop.permute.xlu0 %459
        %463 = vset.pattern.permute.xlu0 0
        %464 = vperm.xlu0 %463, %v450
        %v465 = vpop.permute.xlu0 %464
        %468 = vset.pattern.permute.xlu0 0
        %469 = vperm.xlu0 %468, %v451
        %v470 = vpop.permute.xlu0 %469
        %473 = vset.pattern.permute.xlu0 0
        %474 = vperm.xlu0 %473, %v452
        %v475 = vpop.permute.xlu0 %474
        %478 = vset.pattern.permute.xlu0 0
        %479 = vperm.xlu0 %478, %v453
        %v480 = vpop.permute.xlu0 %479
        %483 = vset.pattern.permute.xlu0 0
        %484 = vperm.xlu0 %483, %v454
        %v485 = vpop.permute.xlu0 %484
        %488 = vset.pattern.permute.xlu0 0
        %489 = vperm.xlu0 %488, %v455
        %v490 = vpop.permute.xlu0 %489
        %493 = vset.pattern.permute.xlu0 0
        %494 = vperm.xlu0 %493, %v456
        %v495 = vpop.permute.xlu0 %494
        %v497 = vmul.f32 %v460, %v335
        %v498 = vmul.f32 %v465, %v336
        %v499 = vmul.f32 %v470, %v337
        %v500 = vmul.f32 %v475, %v338
        %v501 = vmul.f32 %v480, %v339
        %v502 = vmul.f32 %v485, %v340
        %v503 = vmul.f32 %v490, %v341
        %v504 = vmul.f32 %v495, %v342
        %v505 = vsel %vm352, %v497, 0.0
        %v506 = vsel %vm352, %v498, 0.0
        %v507 = vadd.f32 %v505, %v506
        %v508 = vsel %vm352, %v499, 0.0
        %v509 = vadd.f32 %v507, %v508
        %v510 = vsel %vm352, %v500, 0.0
        %v511 = vadd.f32 %v509, %v510
        %v512 = vsel %vm352, %v501, 0.0
        %v513 = vadd.f32 %v511, %v512
        %v514 = vsel %vm352, %v502, 0.0
        %v515 = vadd.f32 %v513, %v514
        %v516 = vsel %vm352, %v503, 0.0
        %v517 = vadd.f32 %v515, %v516
        %v518 = vsel %vm352, %v504, 0.0
        %v519 = vadd.f32 %v517, %v518
        %520 = vst.msk [vmem:[%s313] sm:$0xff] %vm352, %v519
        %v529 = vlaneseq
        %v530 = vand.u32 %v529, 127
        %v531 = vlaneseq
        %v532 = vshrl.u32 %v531, 7
        %v533 = vsub.s32 %v530, %v532
        %v534 = vrot.slane %v355, %v533
        %v535 = vlaneseq
        %v536 = vshrl.u32 %v535, 7
        %v537 = vsub.s32 %v530, %v536
        %v538 = vrot.slane %v358, %v537
        %v539 = vlaneseq
        %v540 = vshrl.u32 %v539, 7
        %v541 = vsub.s32 %v530, %v540
        %v542 = vrot.slane %v361, %v541
        %v543 = vlaneseq
        %v544 = vshrl.u32 %v543, 7
        %v545 = vsub.s32 %v530, %v544
        %v546 = vrot.slane %v364, %v545
        %v547 = vlaneseq
        %v548 = vshrl.u32 %v547, 7
        %v549 = vsub.s32 %v530, %v548
        %v550 = vrot.slane %v367, %v549
        %v551 = vlaneseq
        %v552 = vshrl.u32 %v551, 7
        %v553 = vsub.s32 %v530, %v552
        %v554 = vrot.slane %v370, %v553
        %v555 = vlaneseq
        %v556 = vshrl.u32 %v555, 7
        %v557 = vsub.s32 %v530, %v556
        %v558 = vrot.slane %v373, %v557
        %v559 = vlaneseq
        %v560 = vshrl.u32 %v559, 7
        %v561 = vsub.s32 %v530, %v560
        %v562 = vrot.slane %v376, %v561
        %vm563 = vcmask 1041409
        %v564 = vsel %vm563, %v538, %v534
        %vm565 = vcmask 1042434
        %v566 = vsel %vm565, %v542, %v564
        %vm567 = vcmask 1043459
        %v568 = vsel %vm567, %v546, %v566
        %vm569 = vcmask 1044484
        %v570 = vsel %vm569, %v550, %v568
        %vm571 = vcmask 1045509
        %v572 = vsel %vm571, %v554, %v570
        %vm573 = vcmask 1046534
        %v574 = vsel %vm573, %v558, %v572
        %vm575 = vcmask 1047559
        %v576 = vsel %vm575, %v562, %v574
        %578 = vxpose.xlu0.b32.start [1/16] %v576, 128
        %579 = vxpose.xlu0.b32.cont [2/16] 0.0, 128
        %580 = vxpose.xlu0.b32.cont [3/16] 0.0, 128
        %581 = vxpose.xlu0.b32.cont [4/16] 0.0, 128
        %582 = vxpose.xlu0.b32.cont [5/16] 0.0, 128
        %583 = vxpose.xlu0.b32.cont [6/16] 0.0, 128
        %584 = vxpose.xlu0.b32.cont [7/16] 0.0, 128
        %585 = vxpose.xlu0.b32.cont [8/16] 0.0, 128
        %586 = vxpose.xlu0.b32.cont [9/16] 0.0, 128
        %587 = vxpose.xlu0.b32.cont [10/16] 0.0, 128
        %588 = vxpose.xlu0.b32.cont [11/16] 0.0, 128
        %589 = vxpose.xlu0.b32.cont [12/16] 0.0, 128
        %590 = vxpose.xlu0.b32.cont [13/16] 0.0, 128
        %591 = vxpose.xlu0.b32.cont [14/16] 0.0, 128
        %592 = vxpose.xlu0.b32.cont [15/16] 0.0, 128
        %593 = vxpose.xlu0.b32.end [16/16] 0.0, 128
        %v594 = vpop.trf.xlu0
        %v595 = vpop.trf.xlu0
        %v596 = vpop.trf.xlu0
        %v597 = vpop.trf.xlu0
        %v598 = vpop.trf.xlu0
        %v599 = vpop.trf.xlu0
        %v600 = vpop.trf.xlu0
        %v601 = vpop.trf.xlu0
        %v602 = vpop.trf.xlu0
        %v603 = vpop.trf.xlu0
        %v604 = vpop.trf.xlu0
        %v605 = vpop.trf.xlu0
        %v606 = vpop.trf.xlu0
        %v607 = vpop.trf.xlu0
        %v608 = vpop.trf.xlu0
        %v609 = vpop.trf.xlu0
        %610 = vset.pattern.permute.xlu0 0
        %611 = vperm.xlu0 %610, %v343
        %v612 = vpop.permute.xlu0 %611
        %vm613 = vcmp.ge.s32.totalorder %v530, %v612
        %v614 = vsel %vm613, -1e+09, %v594
        %616 = vset.pattern.permute.xlu0 0
        %617 = vperm.xlu0 %616, %v408
        %v618 = vpop.permute.xlu0 %617
        %v620 = vsub.f32 %v614, %v618
        %v621 = vmul.f32 %v620, 1.442695
        %v622 = vpow.pop %v621
        %624 = vset.pattern.permute.xlu0 0
        %625 = vperm.xlu0 %624, %v448
        %v626 = vpop.permute.xlu0 %625
        %v628 = vmul.f32 %v622, %v626
        %vm629 = vcmask 64512
        %630 = vst.msk [vmem:[%s325] sm:$0xff] %vm629, %v628
        %p631 = scmp.lt.s32.totalorder %s26, 1
        %s632 = scalar_select %p631, %s26, 1
        %s633 = smul.addr %s632, 8
        %s634 = scalar_lea.vmem %s4, %s633
        %s635 = sand.u32 %s164, 1
        %s636 = scalar_lea.sflag [#allocation4], %s635
        %s637 = sand.u32 %s164, 1
        %s638 = smul.addr %s637, 8
        %s639 = scalar_lea.vmem [#allocation7], %s638
        // Predicated region
        $region45: #{tpu_custom_call.1} parent=35 // pred_check
          %p640 = pneg %p148
        $region46: #{tpu_custom_call.1} parent=35 // pred_check_branch
          %642 = sbr.rel (%p640) target = $region48
        $region47: #{tpu_custom_call.1} parent=35 // pred_region
          _
        $region48: #{tpu_custom_call.1} parent=35 // pred_fallthru
          _
        // Predicated region
        $region49: #{tpu_custom_call.1} parent=35 // pred_check
          %p643 = pneg %p174
        $region50: #{tpu_custom_call.1} parent=35 // pred_check_branch
          %645 = sbr.rel (%p643) target = $region52
        $region51: #{tpu_custom_call.1} parent=35 // pred_region
          %s647 = ssub.s32 128, 128
          %648 = vsyncadd %s636, %s647
          %s649 = smul.addr %s26, 128
          %s650 = scalar_lea.hbm %s5, %s649
          %s652 = sshll.u32 %s639, 4
          %s653 = int_to_ptr.vmem [resolvable:$true] %s652
          %655 = dma.vmem_to_hbm [thread:$0]  %s653, 128, %s650, %s636
        $region52: #{tpu_custom_call.1} parent=35 // pred_fallthru
          _
      $region36: #{tpu_custom_call.1} parent=5 // pred_fallthru
        _
      %p656 = scmp.le.s32.totalorder 2, %s21
      // Predicated region
      $region53: #{tpu_custom_call.1} parent=5 // pred_check
        %p657 = pneg %p656
      $region54: #{tpu_custom_call.1} parent=5 // pred_check_branch
        %659 = sbr.rel (%p657) target = $region56
      $region55: #{tpu_custom_call.1} parent=5 // pred_region
        %s660 = ssub.s32 %s21, 2
        // Predicated region
        $region57: #{tpu_custom_call.1} parent=55 // pred_check
          %p661 = pneg %p154
        $region58: #{tpu_custom_call.1} parent=55 // pred_check_branch
          %663 = sbr.rel (%p661) target = $region60
        $region59: #{tpu_custom_call.1} parent=55 // pred_region
          %p664 = scmp.lt.s32.totalorder %s27, 1
          %s665 = scalar_select %p664, %s27, 1
          %s666 = smul.addr %s665, 8
          %s667 = scalar_lea.vmem %s4, %s666
        $region60: #{tpu_custom_call.1} parent=55 // pred_fallthru
          _
        // Predicated region
        $region61: #{tpu_custom_call.1} parent=55 // pred_check
          %p668 = pneg %p180
        $region62: #{tpu_custom_call.1} parent=55 // pred_check_branch
          %670 = sbr.rel (%p668) target = $region64
        $region63: #{tpu_custom_call.1} parent=55 // pred_region
          %s671 = sand.u32 %s165, 1
          %s672 = scalar_lea.sflag [#allocation4], %s671
          %s673 = sand.u32 %s165, 1
          %s674 = smul.addr %s673, 8
          %s675 = scalar_lea.vmem [#allocation7], %s674
          %676 = dma.done %s672, 128
        $region64: #{tpu_custom_call.1} parent=55 // pred_fallthru
          _
      $region56: #{tpu_custom_call.1} parent=5 // pred_fallthru
        _
    $region6: #{tpu_custom_call.1} parent=1 // loop_footer
      %s25 = sadd.s32 1, %s21
    $region7: #{tpu_custom_call.1} parent=1 // loop_footer_branch
      %20 = sbr.rel target = $region3
    $region8: #{tpu_custom_call.1} parent=1 // loop_exit
      _
    %677 = vsyncpa [#allocation3], 1
    %s678 = scalar_lea.sflag [#allocation3], 1
    %679 = vsyncpa %s678, 1
    %680 = vsyncpa [#allocation6], 1
    %s681 = scalar_lea.sflag [#allocation6], 1
    %682 = vsyncpa %s681, 1
    %683 = vsyncpa [#allocation4], 1
    %s684 = scalar_lea.sflag [#allocation4], 1
    %685 = vsyncpa %s684, 1

</llo_original>
